<compile_context>
chip_gen: v7x
topology: tpu7x:2x2x1
jax: 0.10.0
libtpu: 0.0.40
codegen_flags: <defaults>
</compile_context>

<pallas_src>
import functools

import jax
import jax.numpy as jnp
from jax.experimental import pallas as pl
from jax.experimental.pallas import tpu as pltpu

_LANE_CANDIDATES = (8192, 4096, 2048, 1024, 512, 256, 128)
_TARGET_BLOCK_BYTES = 1 << 20  # ~1 MiB per block (per array), double-buffered


def _knockout_kernel(x_ref, o_ref, *, amin, span):
    x = x_ref[...]
    nan_mask = jnp.isnan(x)
    # Upcast in-vreg only (input/output stay in original dtype at the HBM
    # boundary).  f32 arithmetic is safe on all generations (v5e has no bf16
    # VALU) and compute has huge slack in this mem-bound kernel.
    xf = x.astype(jnp.float32)
    scaled = (xf - amin) / span
    out = jnp.where(nan_mask, jnp.float32(-1.0), scaled)
    o_ref[...] = out.astype(o_ref.dtype)


def _run_2d(x2d, amin, span, target_block_bytes, donate_input):
    rows, lanes = x2d.shape
    dtype = x2d.dtype
    itemsize = jnp.dtype(dtype).itemsize

    # Pick block rows so a block is ~target_block_bytes; keep the row count a
    # multiple of 32 (covers f32/bf16/int8 sublane packing) unless the block
    # spans the full array (full-extent blocks are always legal).
    block_rows = max(1, target_block_bytes // (lanes * itemsize))
    if block_rows < rows:
        block_rows = max(32, (block_rows // 32) * 32)
    if block_rows >= rows:
        block_rows = rows

    grid = (pl.cdiv(rows, block_rows),)
    kernel = functools.partial(_knockout_kernel, amin=float(amin), span=float(span))

    extra = {}
    if donate_input:
        # Safe only if the caller no longer needs the input buffer.
        extra["input_output_aliases"] = {0: 0}

    return pl.pallas_call(
        kernel,
        out_shape=jax.ShapeDtypeStruct((rows, lanes), dtype),
        grid_spec=pltpu.PrefetchScalarGridSpec(
            num_scalar_prefetch=0,
            grid=grid,
            in_specs=[pl.BlockSpec((block_rows, lanes), lambda i: (i, 0))],
            out_specs=pl.BlockSpec((block_rows, lanes), lambda i: (i, 0)),
        ),
        compiler_params=pltpu.CompilerParams(
            dimension_semantics=("parallel",),
        ),
        **extra,
    )(x2d)


def cont_knockout_bounded(x, amin=0.0, amax=1.0, *,
                          target_block_bytes=_TARGET_BLOCK_BYTES,
                          donate_input=False):
    """Applies ContKnockoutBounded.forward elementwise via a Pallas TPU kernel."""
    assert amax > amin, f"amin={amin!r} amax={amax!r}"
    orig_shape = x.shape
    span = float(amax) - float(amin)

    n = int(x.size)
    if n == 0:
        return x

    # Fast path: flatten to the widest lane-dense 2D slab that divides exactly
    # (reshape of a contiguous array is free; no padding pass over HBM).
    lane_w = None
    for w in _LANE_CANDIDATES:
        if n % w == 0:
            lane_w = w
            break

    if lane_w is not None:
        x2d = x.reshape(n // lane_w, lane_w)
        out2d = _run_2d(x2d, amin, span, target_block_bytes, donate_input)
        return out2d.reshape(orig_shape)

    # Fallback for element counts not divisible by 128: pad the flat tail to a
    # 128-lane multiple (extra pass, but only for awkward sizes).
    xf = x.reshape(-1)
    n_pad = pl.cdiv(n, 128) * 128
    xf = jnp.pad(xf, (0, n_pad - n))
    out2d = _run_2d(xf.reshape(-1, 128), amin, span, target_block_bytes, False)
    return out2d.reshape(-1)[:n].reshape(orig_shape)


def _reference(x, amin, amax):
    xf = x.astype(jnp.float32)
    out = jnp.where(jnp.isnan(xf), jnp.float32(-1.0), (xf - amin) / (amax - amin))
    return out.astype(x.dtype)


if __name__ == "__main__":
    key = jax.random.PRNGKey(0)
    k1, k2, k3, k4 = jax.random.split(key, 4)

    amin, amax = -1.5, 2.5

    # Case 1: f32 NCHW input, element count divisible by 128 (fast path).
    x = jax.random.normal(k1, (2, 4, 16, 16), dtype=jnp.float32) * 2.0 + 0.5
    x = jnp.where(jax.random.bernoulli(k2, 0.1, x.shape), jnp.nan, x)
    out = jax.block_until_ready(cont_knockout_bounded(x, amin, amax))
    ref = _reference(x, amin, amax)
    assert out.shape == x.shape and out.dtype == x.dtype
    assert jnp.allclose(out, ref, atol=1e-6, rtol=1e-6), "f32 mismatch vs reference"
    assert not jnp.any(jnp.isnan(out)), "NaNs leaked through knockout (f32)"

    # Case 2: bf16 input — narrow dtype kept at the HBM boundary, cast in-kernel.
    xb = jax.random.normal(k3, (2, 4, 16, 16), dtype=jnp.float32).astype(jnp.bfloat16)
    xb = jnp.where(jax.random.bernoulli(k4, 0.1, xb.shape), jnp.nan, xb).astype(jnp.bfloat16)
    outb = jax.block_until_ready(cont_knockout_bounded(xb, amin, amax))
    refb = _reference(xb, amin, amax)
    assert outb.shape == xb.shape and outb.dtype == jnp.bfloat16
    assert jnp.allclose(outb.astype(jnp.float32), refb.astype(jnp.float32),
                        atol=2e-2, rtol=2e-2), "bf16 mismatch vs reference"
    assert not jnp.any(jnp.isnan(outb)), "NaNs leaked through knockout (bf16)"

    # Case 3: awkward size (945 elems, not a multiple of 128) -> padded fallback.
    xo = jax.random.normal(k1, (3, 5, 7, 9), dtype=jnp.float32)
    xo = xo.at[0, 0, 0, 0].set(jnp.nan)
    outo = jax.block_until_ready(cont_knockout_bounded(xo, amin, amax))
    refo = _reference(xo, amin, amax)
    assert outo.shape == xo.shape and outo.dtype == xo.dtype
    assert jnp.allclose(outo, refo, atol=1e-6, rtol=1e-6), "fallback mismatch vs reference"
    assert not jnp.any(jnp.isnan(outo)), "NaNs leaked through knockout (fallback)"

    print("KERNEL_OK")
</pallas_src>

<mosaic_0001>
module attributes {stable_mosaic.version = 11 : i64} {
  func.func @_knockout_kernel(%arg0: i32, %arg1: memref<1x2048xf32, #tpu.memory_space<vmem>>, %arg2: memref<1x2048xf32, #tpu.memory_space<vmem>>) attributes {dimension_semantics = [#tpu.dimension_semantics<parallel>], iteration_bounds = array<i64: 1>, scalar_prefetch = 0 : i64, scratch_operands = 0 : i64, tpu.core_type = #tpu.core_type<tc>, window_params = [{transform_indices = @transform_0, window_bounds = array<i64: 1, 2048>}, {transform_indices = @transform_1, window_bounds = array<i64: 1, 2048>}]} {
    %c0 = arith.constant 0 : index
    %c0_0 = arith.constant 0 : index
    %0 = vector.load %arg1[%c0, %c0_0] : memref<1x2048xf32, #tpu.memory_space<vmem>>, vector<1x2048xf32>
    %1 = arith.cmpf one, %0, %0 : vector<1x2048xf32>
    %cst = arith.constant -1.500000e+00 : f32
    %2 = vector.broadcast %cst : f32 to vector<1x2048xf32>
    %3 = arith.subf %0, %2 : vector<1x2048xf32>
    %cst_1 = arith.constant 4.000000e+00 : f32
    %4 = vector.broadcast %cst_1 : f32 to vector<1x2048xf32>
    %5 = arith.divf %3, %4 : vector<1x2048xf32>
    %cst_2 = arith.constant -1.000000e+00 : f32
    %6 = vector.broadcast %cst_2 : f32 to vector<1x2048xf32>
    %7 = arith.select %1, %6, %5 : vector<1x2048xi1>, vector<1x2048xf32>
    %c0_3 = arith.constant 0 : index
    %c0_4 = arith.constant 0 : index
    %8 = vector.load %arg2[%c0_3, %c0_4] : memref<1x2048xf32, #tpu.memory_space<vmem>>, vector<1x2048xf32>
    tpu.vector_store %arg2[%c0_3, %c0_4], %7 {strides = array<i32>} : memref<1x2048xf32, #tpu.memory_space<vmem>>, vector<1x2048xf32>,
    return
  }
  func.func @transform_0(%arg0: i32) -> (i32, i32) {
    %c0_i32 = arith.constant 0 : i32
    %c0_i32_0 = arith.constant 0 : i32
    return %arg0, %c0_i32 : i32, i32
  }
  func.func @transform_1(%arg0: i32) -> (i32, i32) {
    %c0_i32 = arith.constant 0 : i32
    %c0_i32_0 = arith.constant 0 : i32
    return %arg0, %c0_i32 : i32, i32
  }
}

</mosaic_0001>

<llo_original>
// kernel: tpu_custom_call.1
$region0: #{tpu_custom_call.1}
  #allocation0 [shape = 'u32[]', space=smem, size = 0x4, offset = 0x4, fixed_abs, tag = 'smem constant byte address 0x4 - core index']
  #allocation1 [shape = 'u32[144,128]{1,0:T(1,128)}', space=vmem, size = 0x12000, scoped, tag = 'internal scratch']
  %s0 = inlined_call_operand.hbm [shape: f32[1,2048], index: 0, kind: input, shape index: {}]
  %s1 = inlined_call_operand.hbm [shape: f32[1,2048], index: 1, kind: output, shape index: {}]
  %s2 = sld [smem:[#allocation0]]
  $region18: #{tpu_custom_call.1} parent=0
    _
  %s4 = ssub.s32 1, %s2
  %s5 = scalar_select 0, %s4, %s2
  $region1: #{tpu_custom_call.1} parent=0
    #allocation2 [shape = 'u8[8192]{0}', space=vmem, size = 0x2000, scoped, tag = 'input window, operand 0, single buffered']
    #allocation3 [shape = 's32[1]{0}', space=sflag, size = 0x4, scoped, tag = 'scoped memory for tpu_custom_call.1']
    #allocation4 [shape = 's32[1]{0}', space=sflag, size = 0x4, scoped, tag = 'scoped memory for tpu_custom_call.1']
    #allocation5 [shape = 'u8[8192]{0}', space=vmem, size = 0x2000, scoped, tag = 'output window, operand 0, single buffered']
    %6 = vsyncpa [#allocation3], 0
    %7 = vsyncpa [#allocation4], 0
    // Predicated region
    $region2: #{tpu_custom_call.1} parent=1 // pred_check
      _
    $region3: #{tpu_custom_call.1} parent=1 // pred_check_branch
      %9 = sbr.rel (0) target = $region5
    $region4: #{tpu_custom_call.1} parent=1 // pred_region
      %s11 = ssub.s32 256, 256
      %12 = vsyncadd [#allocation3], %s11
      %s14 = sshll.u32 [#allocation2], 4
      %s15 = int_to_ptr.vmem [resolvable:$true] %s14
      %17 = dma.hbm_to_vmem [thread:$0]  %s0, 256, %s15, [#allocation3]
    $region5: #{tpu_custom_call.1} parent=1 // pred_fallthru
      _
    // Predicated region
    $region6: #{tpu_custom_call.1} parent=1 // pred_check
      _
    $region7: #{tpu_custom_call.1} parent=1 // pred_check_branch
      %19 = sbr.rel (0) target = $region9
    $region8: #{tpu_custom_call.1} parent=1 // pred_region
      %20 = dma.done [#allocation3], 256
    $region9: #{tpu_custom_call.1} parent=1 // pred_fallthru
      _
    %v21 = vld [vmem:[#allocation2] sm:$0xff]
    %v22 = vld [vmem:[#allocation2 + $0x8] sm:$0xff]
    %vm23 = vcmp.ne.f32.partialorder %v21, %v21
    %vm24 = vcmp.ne.f32.partialorder %v22, %v22
    %v25 = vsub.f32 %v21, -1.5
    %v26 = vsub.f32 %v22, -1.5
    %v27 = vrcp.pop 4.0
    %v28 = vmul.f32 %v25, %v27
    %v29 = vmul.f32 %v26, %v27
    %v30 = vsel %vm23, -1.0, %v28
    %v31 = vsel %vm24, -1.0, %v29
    %32 = vst [vmem:[#allocation5] sm:$0xff] %v30
    %33 = vst [vmem:[#allocation5 + $0x8] sm:$0xff] %v31
    // Predicated region
    $region10: #{tpu_custom_call.1} parent=1 // pred_check
      _
    $region11: #{tpu_custom_call.1} parent=1 // pred_check_branch
      %35 = sbr.rel (0) target = $region13
    $region12: #{tpu_custom_call.1} parent=1 // pred_region
      %s37 = ssub.s32 256, 256
      %38 = vsyncadd [#allocation4], %s37
      %s40 = sshll.u32 [#allocation5], 4
      %s41 = int_to_ptr.vmem [resolvable:$true] %s40
      %43 = dma.vmem_to_hbm [thread:$0]  %s41, 256, %s1, [#allocation4]
    $region13: #{tpu_custom_call.1} parent=1 // pred_fallthru
      _
    // Predicated region
    $region14: #{tpu_custom_call.1} parent=1 // pred_check
      _
    $region15: #{tpu_custom_call.1} parent=1 // pred_check_branch
      %45 = sbr.rel (0) target = $region17
    $region16: #{tpu_custom_call.1} parent=1 // pred_region
      %46 = dma.done [#allocation4], 256
    $region17: #{tpu_custom_call.1} parent=1 // pred_fallthru
      _
    %47 = vsyncpa [#allocation3], 1
    %48 = vsyncpa [#allocation4], 1

</llo_original>
